<compile_context>
chip_gen: v7x
topology: tpu7x:2x2x1
jax: 0.10.0
libtpu: 0.0.40
codegen_flags: <defaults>
</compile_context>

<pallas_src>
import jax
import jax.numpy as jnp
from jax.experimental import pallas as pl
from jax.experimental.pallas import tpu as pltpu


# ---- constants -------------------------------------------------------------
# D65 white point folded into the kornia XYZ -> linear-RGB matrix (column scale),
# saving two multiplies per pixel.
_WX, _WY, _WZ = 0.95047, 1.0, 1.08883
_M00, _M01, _M02 = 3.2404813432005266 * _WX, -1.5371515162713185 * _WY, -0.498536326168888 * _WZ
_M10, _M11, _M12 = -0.9692549499965682 * _WX, 1.8759900014898907 * _WY, 0.0415559265582928 * _WZ
_M20, _M21, _M22 = 0.0556466391351772 * _WX, -0.2040413383665112 * _WY, 1.0573110696453443 * _WZ

_INV_116 = 1.0 / 116.0
_INV_500 = 1.0 / 500.0
_INV_200 = 1.0 / 200.0
_INV_7787 = 1.0 / 7.787
_FOUR_29 = 4.0 / 29.0


def _lab_to_rgb_kernel(x_ref, o_ref):
    # x_ref / o_ref: (1, 3, block_rows, lanes) float32 tiles in VMEM.
    # Load + clamp per channel (no clipped copy of the whole block is materialized).
    L = jnp.clip(x_ref[0, 0], 0.0, 1.0)
    a = jnp.clip(x_ref[0, 1], 0.0, 1.0)
    b_lab = jnp.clip(x_ref[0, 2], 0.0, 1.0)

    # Lab -> f(x), f(y), f(z)  (reciprocal multiplies instead of divides).
    fy = (L + 16.0) * _INV_116
    fx = a * _INV_500 + fy
    fz = jnp.maximum(fy - b_lab * _INV_200, 0.0)  # kornia clamps f(z) at 0

    def finv(t):
        return jnp.where(t > 0.2068966, t * t * t, (t - _FOUR_29) * _INV_7787)

    x_ = finv(fx)
    y_ = finv(fy)
    z_ = finv(fz)

    # XYZ -> linear RGB (D65 white point already folded into the coefficients).
    r = _M00 * x_ + _M01 * y_ + _M02 * z_
    g = _M10 * x_ + _M11 * y_ + _M12 * z_
    b = _M20 * x_ + _M21 * y_ + _M22 * z_

    def lin2srgb(c):
        # pow lowers to exp/log on the EUP (separate bundle slot).
        return jnp.where(
            c > 0.0031308,
            1.055 * jnp.power(jnp.maximum(c, 0.0031308), 1.0 / 2.4) - 0.055,
            12.92 * c,
        )

    # Per-channel stores with the module's outer clamp (+ kornia's clip) fused in.
    o_ref[0, 0] = jnp.clip(lin2srgb(r), 0.0, 1.0)
    o_ref[0, 1] = jnp.clip(lin2srgb(g), 0.0, 1.0)
    o_ref[0, 2] = jnp.clip(lin2srgb(b), 0.0, 1.0)


def _round_up(v: int, m: int) -> int:
    return ((v + m - 1) // m) * m


def lab_to_rgb_effect(x: jax.Array, *, lanes: int = 512, max_block_rows: int = 512) -> jax.Array:
    """x: (B, 3, H, W) float32 Lab -> (B, 3, H, W) float32 sRGB in [0, 1]."""
    B, C, H, W = x.shape
    assert C == 3, "LabToRGBEffect expects 3 channels (L, a, b)"

    n = H * W
    total_rows = -(-n // lanes)                                  # rows of width `lanes`
    block_rows = min(max_block_rows, _round_up(total_rows, 8))   # multiple of 8 sublanes
    padded_rows = _round_up(total_rows, block_rows)
    n_pad = padded_rows * lanes

    # Lane-dense reshape: each channel plane becomes (padded_rows, lanes), lanes % 128 == 0.
    xf = x.reshape(B, 3, n)
    if n_pad != n:
        xf = jnp.pad(xf, ((0, 0), (0, 0), (0, n_pad - n)))
    xf = xf.reshape(B, 3, padded_rows, lanes)

    block = (1, 3, block_rows, lanes)
    out = pl.pallas_call(
        _lab_to_rgb_kernel,
        out_shape=jax.ShapeDtypeStruct((B, 3, padded_rows, lanes), x.dtype),
        grid=(B, padded_rows // block_rows),
        in_specs=[pl.BlockSpec(block, lambda bi, si: (bi, 0, si, 0))],
        out_specs=pl.BlockSpec(block, lambda bi, si: (bi, 0, si, 0)),
        compiler_params=pltpu.CompilerParams(
            dimension_semantics=("parallel", "parallel"),
            vmem_limit_bytes=32 * 1024 * 1024,   # ~12 MiB actually used; safe on v5e/v6e/v7x
        ),
    )(xf)

    out = out.reshape(B, 3, n_pad)
    if n_pad != n:
        out = out[:, :, :n]
    return out.reshape(B, 3, H, W)


# ---- pure-JAX reference (for sanity check) ---------------------------------
def _lab_to_rgb_ref(x):
    x = jnp.clip(x, 0.0, 1.0)
    L, a, b_ = x[:, 0], x[:, 1], x[:, 2]
    fy = (L + 16.0) / 116.0
    fx = a / 500.0 + fy
    fz = jnp.maximum(fy - b_ / 200.0, 0.0)

    def finv(t):
        return jnp.where(t > 0.2068966, t ** 3, (t - 4.0 / 29.0) / 7.787)

    X = finv(fx) * 0.95047
    Y = finv(fy)
    Z = finv(fz) * 1.08883
    r = 3.2404813432005266 * X - 1.5371515162713185 * Y - 0.498536326168888 * Z
    g = -0.9692549499965682 * X + 1.8759900014898907 * Y + 0.0415559265582928 * Z
    b = 0.0556466391351772 * X - 0.2040413383665112 * Y + 1.0573110696453443 * Z

    def lin2srgb(c):
        return jnp.where(
            c > 0.0031308,
            1.055 * jnp.power(jnp.maximum(c, 0.0031308), 1.0 / 2.4) - 0.055,
            12.92 * c,
        )

    rgb = jnp.stack([lin2srgb(r), lin2srgb(g), lin2srgb(b)], axis=1)
    return jnp.clip(rgb, 0.0, 1.0)


if __name__ == "__main__":
    key = jax.random.PRNGKey(0)
    x = jax.random.uniform(key, (2, 3, 16, 16), dtype=jnp.float32, minval=-0.5, maxval=1.5)

    out = jax.block_until_ready(lab_to_rgb_effect(x))
    ref = _lab_to_rgb_ref(x)
    assert out.shape == (2, 3, 16, 16)
    assert jnp.allclose(out, ref, atol=1e-5, rtol=1e-5)

    # Non-(8,128)-friendly spatial shape exercises the lane-dense pad/slice path.
    x2 = jax.random.uniform(jax.random.PRNGKey(0), (1, 3, 20, 37),
                            dtype=jnp.float32, minval=-0.5, maxval=1.5)
    out2 = jax.block_until_ready(lab_to_rgb_effect(x2))
    assert jnp.allclose(out2, _lab_to_rgb_ref(x2), atol=1e-5, rtol=1e-5)

    print("KERNEL_OK")
</pallas_src>

<mosaic_0001>
module attributes {stable_mosaic.version = 11 : i64} {
  func.func @_lab_to_rgb_kernel(%arg0: i32, %arg1: i32, %arg2: memref<1x3x8x512xf32, #tpu.memory_space<vmem>>, %arg3: memref<1x3x8x512xf32, #tpu.memory_space<vmem>>) attributes {dimension_semantics = [#tpu.dimension_semantics<parallel>, #tpu.dimension_semantics<parallel>], iteration_bounds = array<i64: 2, 1>, scalar_prefetch = 0 : i64, scratch_operands = 0 : i64, tpu.core_type = #tpu.core_type<tc>, window_params = [{transform_indices = @transform_0, window_bounds = array<i64: 1, 3, 8, 512>}, {transform_indices = @transform_1, window_bounds = array<i64: 1, 3, 8, 512>}]} {
    %c0 = arith.constant 0 : index
    %c0_0 = arith.constant 0 : index
    %c0_1 = arith.constant 0 : index
    %c0_2 = arith.constant 0 : index
    %0 = vector.load %arg2[%c0, %c0_0, %c0_1, %c0_2] : memref<1x3x8x512xf32, #tpu.memory_space<vmem>>, vector<1x1x8x512xf32>
    %1 = vector.shape_cast %0 : vector<1x1x8x512xf32> to vector<8x512xf32>
    %cst = arith.constant 0.000000e+00 : f32
    %cst_3 = arith.constant 1.000000e+00 : f32
    %2 = vector.broadcast %cst : f32 to vector<8x512xf32>
    %3 = arith.maximumf %2, %1 : vector<8x512xf32>
    %4 = vector.broadcast %cst_3 : f32 to vector<8x512xf32>
    %5 = arith.minimumf %4, %3 : vector<8x512xf32>
    %c0_4 = arith.constant 0 : index
    %c1 = arith.constant 1 : index
    %c0_5 = arith.constant 0 : index
    %c0_6 = arith.constant 0 : index
    %6 = vector.load %arg2[%c0_4, %c1, %c0_5, %c0_6] : memref<1x3x8x512xf32, #tpu.memory_space<vmem>>, vector<1x1x8x512xf32>
    %7 = vector.shape_cast %6 : vector<1x1x8x512xf32> to vector<8x512xf32>
    %cst_7 = arith.constant 0.000000e+00 : f32
    %cst_8 = arith.constant 1.000000e+00 : f32
    %8 = vector.broadcast %cst_7 : f32 to vector<8x512xf32>
    %9 = arith.maximumf %8, %7 : vector<8x512xf32>
    %10 = vector.broadcast %cst_8 : f32 to vector<8x512xf32>
    %11 = arith.minimumf %10, %9 : vector<8x512xf32>
    %c0_9 = arith.constant 0 : index
    %c2 = arith.constant 2 : index
    %c0_10 = arith.constant 0 : index
    %c0_11 = arith.constant 0 : index
    %12 = vector.load %arg2[%c0_9, %c2, %c0_10, %c0_11] : memref<1x3x8x512xf32, #tpu.memory_space<vmem>>, vector<1x1x8x512xf32>
    %13 = vector.shape_cast %12 : vector<1x1x8x512xf32> to vector<8x512xf32>
    %cst_12 = arith.constant 0.000000e+00 : f32
    %cst_13 = arith.constant 1.000000e+00 : f32
    %14 = vector.broadcast %cst_12 : f32 to vector<8x512xf32>
    %15 = arith.maximumf %14, %13 : vector<8x512xf32>
    %16 = vector.broadcast %cst_13 : f32 to vector<8x512xf32>
    %17 = arith.minimumf %16, %15 : vector<8x512xf32>
    %cst_14 = arith.constant 1.600000e+01 : f32
    %18 = vector.broadcast %cst_14 : f32 to vector<8x512xf32>
    %19 = arith.addf %5, %18 : vector<8x512xf32>
    %cst_15 = arith.constant 8.620690e-03 : f32
    %20 = vector.broadcast %cst_15 : f32 to vector<8x512xf32>
    %21 = arith.mulf %19, %20 : vector<8x512xf32>
    %cst_16 = arith.constant 2.000000e-03 : f32
    %22 = vector.broadcast %cst_16 : f32 to vector<8x512xf32>
    %23 = arith.mulf %11, %22 : vector<8x512xf32>
    %24 = arith.addf %23, %21 : vector<8x512xf32>
    %cst_17 = arith.constant 5.000000e-03 : f32
    %25 = vector.broadcast %cst_17 : f32 to vector<8x512xf32>
    %26 = arith.mulf %17, %25 : vector<8x512xf32>
    %27 = arith.subf %21, %26 : vector<8x512xf32>
    %cst_18 = arith.constant 0.000000e+00 : f32
    %28 = vector.broadcast %cst_18 : f32 to vector<8x512xf32>
    %29 = arith.maximumf %27, %28 : vector<8x512xf32>
    %cst_19 = arith.constant 0.206896603 : f32
    %30 = vector.broadcast %cst_19 : f32 to vector<8x512xf32>
    %31 = arith.cmpf ogt, %24, %30 : vector<8x512xf32>
    %32 = arith.mulf %24, %24 : vector<8x512xf32>
    %33 = arith.mulf %32, %24 : vector<8x512xf32>
    %cst_20 = arith.constant 0.137931034 : f32
    %34 = vector.broadcast %cst_20 : f32 to vector<8x512xf32>
    %35 = arith.subf %24, %34 : vector<8x512xf32>
    %cst_21 = arith.constant 0.128419161 : f32
    %36 = vector.broadcast %cst_21 : f32 to vector<8x512xf32>
    %37 = arith.mulf %35, %36 : vector<8x512xf32>
    %38 = arith.select %31, %33, %37 : vector<8x512xi1>, vector<8x512xf32>
    %cst_22 = arith.constant 0.206896603 : f32
    %39 = vector.broadcast %cst_22 : f32 to vector<8x512xf32>
    %40 = arith.cmpf ogt, %21, %39 : vector<8x512xf32>
    %41 = arith.mulf %21, %21 : vector<8x512xf32>
    %42 = arith.mulf %41, %21 : vector<8x512xf32>
    %cst_23 = arith.constant 0.137931034 : f32
    %43 = vector.broadcast %cst_23 : f32 to vector<8x512xf32>
    %44 = arith.subf %21, %43 : vector<8x512xf32>
    %cst_24 = arith.constant 0.128419161 : f32
    %45 = vector.broadcast %cst_24 : f32 to vector<8x512xf32>
    %46 = arith.mulf %44, %45 : vector<8x512xf32>
    %47 = arith.select %40, %42, %46 : vector<8x512xi1>, vector<8x512xf32>
    %cst_25 = arith.constant 0.206896603 : f32
    %48 = vector.broadcast %cst_25 : f32 to vector<8x512xf32>
    %49 = arith.cmpf ogt, %29, %48 : vector<8x512xf32>
    %50 = arith.mulf %29, %29 : vector<8x512xf32>
    %51 = arith.mulf %50, %29 : vector<8x512xf32>
    %cst_26 = arith.constant 0.137931034 : f32
    %52 = vector.broadcast %cst_26 : f32 to vector<8x512xf32>
    %53 = arith.subf %29, %52 : vector<8x512xf32>
    %cst_27 = arith.constant 0.128419161 : f32
    %54 = vector.broadcast %cst_27 : f32 to vector<8x512xf32>
    %55 = arith.mulf %53, %54 : vector<8x512xf32>
    %56 = arith.select %49, %51, %55 : vector<8x512xi1>, vector<8x512xf32>
    %cst_28 = arith.constant 3.07998037 : f32
    %57 = vector.broadcast %cst_28 : f32 to vector<8x512xf32>
    %58 = arith.mulf %57, %38 : vector<8x512xf32>
    %cst_29 = arith.constant -1.53715158 : f32
    %59 = vector.broadcast %cst_29 : f32 to vector<8x512xf32>
    %60 = arith.mulf %59, %47 : vector<8x512xf32>
    %61 = arith.addf %58, %60 : vector<8x512xf32>
    %cst_30 = arith.constant -0.542821288 : f32
    %62 = vector.broadcast %cst_30 : f32 to vector<8x512xf32>
    %63 = arith.mulf %62, %56 : vector<8x512xf32>
    %64 = arith.addf %61, %63 : vector<8x512xf32>
    %cst_31 = arith.constant -0.92124778 : f32
    %65 = vector.broadcast %cst_31 : f32 to vector<8x512xf32>
    %66 = arith.mulf %65, %38 : vector<8x512xf32>
    %cst_32 = arith.constant 1.875990e+00 : f32
    %67 = vector.broadcast %cst_32 : f32 to vector<8x512xf32>
    %68 = arith.mulf %67, %47 : vector<8x512xf32>
    %69 = arith.addf %66, %68 : vector<8x512xf32>
    %cst_33 = arith.constant 0.0452473387 : f32
    %70 = vector.broadcast %cst_33 : f32 to vector<8x512xf32>
    %71 = arith.mulf %70, %56 : vector<8x512xf32>
    %72 = arith.addf %69, %71 : vector<8x512xf32>
    %cst_34 = arith.constant 0.0528904609 : f32
    %73 = vector.broadcast %cst_34 : f32 to vector<8x512xf32>
    %74 = arith.mulf %73, %38 : vector<8x512xf32>
    %cst_35 = arith.constant -0.204041332 : f32
    %75 = vector.broadcast %cst_35 : f32 to vector<8x512xf32>
    %76 = arith.mulf %75, %47 : vector<8x512xf32>
    %77 = arith.addf %74, %76 : vector<8x512xf32>
    %cst_36 = arith.constant 1.151232 : f32
    %78 = vector.broadcast %cst_36 : f32 to vector<8x512xf32>
    %79 = arith.mulf %78, %56 : vector<8x512xf32>
    %80 = arith.addf %77, %79 : vector<8x512xf32>
    %cst_37 = arith.constant 3.130800e-03 : f32
    %81 = vector.broadcast %cst_37 : f32 to vector<8x512xf32>
    %82 = arith.cmpf ogt, %64, %81 : vector<8x512xf32>
    %cst_38 = arith.constant 3.130800e-03 : f32
    %83 = vector.broadcast %cst_38 : f32 to vector<8x512xf32>
    %84 = arith.maximumf %64, %83 : vector<8x512xf32>
    %cst_39 = arith.constant 0.416666657 : f32
    %85 = vector.broadcast %cst_39 : f32 to vector<8x512xf32>
    %86 = math.powf %84, %85 : vector<8x512xf32>
    %cst_40 = arith.constant 1.055000e+00 : f32
    %87 = vector.broadcast %cst_40 : f32 to vector<8x512xf32>
    %88 = arith.mulf %87, %86 : vector<8x512xf32>
    %cst_41 = arith.constant 5.500000e-02 : f32
    %89 = vector.broadcast %cst_41 : f32 to vector<8x512xf32>
    %90 = arith.subf %88, %89 : vector<8x512xf32>
    %cst_42 = arith.constant 1.292000e+01 : f32
    %91 = vector.broadcast %cst_42 : f32 to vector<8x512xf32>
    %92 = arith.mulf %91, %64 : vector<8x512xf32>
    %93 = arith.select %82, %90, %92 : vector<8x512xi1>, vector<8x512xf32>
    %cst_43 = arith.constant 0.000000e+00 : f32
    %cst_44 = arith.constant 1.000000e+00 : f32
    %94 = vector.broadcast %cst_43 : f32 to vector<8x512xf32>
    %95 = arith.maximumf %94, %93 : vector<8x512xf32>
    %96 = vector.broadcast %cst_44 : f32 to vector<8x512xf32>
    %97 = arith.minimumf %96, %95 : vector<8x512xf32>
    %c0_45 = arith.constant 0 : index
    %c0_46 = arith.constant 0 : index
    %c0_47 = arith.constant 0 : index
    %c0_48 = arith.constant 0 : index
    %98 = vector.load %arg3[%c0_45, %c0_46, %c0_47, %c0_48] : memref<1x3x8x512xf32, #tpu.memory_space<vmem>>, vector<1x1x8x512xf32>
    %99 = vector.shape_cast %98 : vector<1x1x8x512xf32> to vector<8x512xf32>
    %100 = vector.shape_cast %97 : vector<8x512xf32> to vector<1x1x8x512xf32>
    tpu.vector_store %arg3[%c0_45, %c0_46, %c0_47, %c0_48], %100 {strides = array<i32>} : memref<1x3x8x512xf32, #tpu.memory_space<vmem>>, vector<1x1x8x512xf32>,
    %cst_49 = arith.constant 3.130800e-03 : f32
    %101 = vector.broadcast %cst_49 : f32 to vector<8x512xf32>
    %102 = arith.cmpf ogt, %72, %101 : vector<8x512xf32>
    %cst_50 = arith.constant 3.130800e-03 : f32
    %103 = vector.broadcast %cst_50 : f32 to vector<8x512xf32>
    %104 = arith.maximumf %72, %103 : vector<8x512xf32>
    %cst_51 = arith.constant 0.416666657 : f32
    %105 = vector.broadcast %cst_51 : f32 to vector<8x512xf32>
    %106 = math.powf %104, %105 : vector<8x512xf32>
    %cst_52 = arith.constant 1.055000e+00 : f32
    %107 = vector.broadcast %cst_52 : f32 to vector<8x512xf32>
    %108 = arith.mulf %107, %106 : vector<8x512xf32>
    %cst_53 = arith.constant 5.500000e-02 : f32
    %109 = vector.broadcast %cst_53 : f32 to vector<8x512xf32>
    %110 = arith.subf %108, %109 : vector<8x512xf32>
    %cst_54 = arith.constant 1.292000e+01 : f32
    %111 = vector.broadcast %cst_54 : f32 to vector<8x512xf32>
    %112 = arith.mulf %111, %72 : vector<8x512xf32>
    %113 = arith.select %102, %110, %112 : vector<8x512xi1>, vector<8x512xf32>
    %cst_55 = arith.constant 0.000000e+00 : f32
    %cst_56 = arith.constant 1.000000e+00 : f32
    %114 = vector.broadcast %cst_55 : f32 to vector<8x512xf32>
    %115 = arith.maximumf %114, %113 : vector<8x512xf32>
    %116 = vector.broadcast %cst_56 : f32 to vector<8x512xf32>
    %117 = arith.minimumf %116, %115 : vector<8x512xf32>
    %c0_57 = arith.constant 0 : index
    %c1_58 = arith.constant 1 : index
    %c0_59 = arith.constant 0 : index
    %c0_60 = arith.constant 0 : index
    %118 = vector.load %arg3[%c0_57, %c1_58, %c0_59, %c0_60] : memref<1x3x8x512xf32, #tpu.memory_space<vmem>>, vector<1x1x8x512xf32>
    %119 = vector.shape_cast %118 : vector<1x1x8x512xf32> to vector<8x512xf32>
    %120 = vector.shape_cast %117 : vector<8x512xf32> to vector<1x1x8x512xf32>
    tpu.vector_store %arg3[%c0_57, %c1_58, %c0_59, %c0_60], %120 {strides = array<i32>} : memref<1x3x8x512xf32, #tpu.memory_space<vmem>>, vector<1x1x8x512xf32>,
    %cst_61 = arith.constant 3.130800e-03 : f32
    %121 = vector.broadcast %cst_61 : f32 to vector<8x512xf32>
    %122 = arith.cmpf ogt, %80, %121 : vector<8x512xf32>
    %cst_62 = arith.constant 3.130800e-03 : f32
    %123 = vector.broadcast %cst_62 : f32 to vector<8x512xf32>
    %124 = arith.maximumf %80, %123 : vector<8x512xf32>
    %cst_63 = arith.constant 0.416666657 : f32
    %125 = vector.broadcast %cst_63 : f32 to vector<8x512xf32>
    %126 = math.powf %124, %125 : vector<8x512xf32>
    %cst_64 = arith.constant 1.055000e+00 : f32
    %127 = vector.broadcast %cst_64 : f32 to vector<8x512xf32>
    %128 = arith.mulf %127, %126 : vector<8x512xf32>
    %cst_65 = arith.constant 5.500000e-02 : f32
    %129 = vector.broadcast %cst_65 : f32 to vector<8x512xf32>
    %130 = arith.subf %128, %129 : vector<8x512xf32>
    %cst_66 = arith.constant 1.292000e+01 : f32
    %131 = vector.broadcast %cst_66 : f32 to vector<8x512xf32>
    %132 = arith.mulf %131, %80 : vector<8x512xf32>
    %133 = arith.select %122, %130, %132 : vector<8x512xi1>, vector<8x512xf32>
    %cst_67 = arith.constant 0.000000e+00 : f32
    %cst_68 = arith.constant 1.000000e+00 : f32
    %134 = vector.broadcast %cst_67 : f32 to vector<8x512xf32>
    %135 = arith.maximumf %134, %133 : vector<8x512xf32>
    %136 = vector.broadcast %cst_68 : f32 to vector<8x512xf32>
    %137 = arith.minimumf %136, %135 : vector<8x512xf32>
    %c0_69 = arith.constant 0 : index
    %c2_70 = arith.constant 2 : index
    %c0_71 = arith.constant 0 : index
    %c0_72 = arith.constant 0 : index
    %138 = vector.load %arg3[%c0_69, %c2_70, %c0_71, %c0_72] : memref<1x3x8x512xf32, #tpu.memory_space<vmem>>, vector<1x1x8x512xf32>
    %139 = vector.shape_cast %138 : vector<1x1x8x512xf32> to vector<8x512xf32>
    %140 = vector.shape_cast %137 : vector<8x512xf32> to vector<1x1x8x512xf32>
    tpu.vector_store %arg3[%c0_69, %c2_70, %c0_71, %c0_72], %140 {strides = array<i32>} : memref<1x3x8x512xf32, #tpu.memory_space<vmem>>, vector<1x1x8x512xf32>,
    return
  }
  func.func @transform_0(%arg0: i32, %arg1: i32) -> (i32, i32, i32, i32) {
    %c0_i32 = arith.constant 0 : i32
    %c0_i32_0 = arith.constant 0 : i32
    %c0_i32_1 = arith.constant 0 : i32
    return %arg0, %c0_i32, %arg1, %c0_i32_0 : i32, i32, i32, i32
  }
  func.func @transform_1(%arg0: i32, %arg1: i32) -> (i32, i32, i32, i32) {
    %c0_i32 = arith.constant 0 : i32
    %c0_i32_0 = arith.constant 0 : i32
    %c0_i32_1 = arith.constant 0 : i32
    return %arg0, %c0_i32, %arg1, %c0_i32_0 : i32, i32, i32, i32
  }
}

</mosaic_0001>

<llo_original>
// kernel: tpu_custom_call.1
$region0: #{tpu_custom_call.1}
  #allocation0 [shape = 'u32[]', space=smem, size = 0x4, offset = 0x4, fixed_abs, tag = 'smem constant byte address 0x4 - core index']
  #allocation1 [shape = 'u32[144,128]{1,0:T(1,128)}', space=vmem, size = 0x12000, scoped, tag = 'internal scratch']
  %s0 = inlined_call_operand.hbm [shape: f32[2,3,8,512], index: 0, kind: input, shape index: {}]
  %s1 = inlined_call_operand.hbm [shape: f32[2,3,8,512], index: 1, kind: output, shape index: {}]
  %s2 = sld [smem:[#allocation0]]
  $region41: #{tpu_custom_call.1} parent=0
    _
  %s4 = ssub.s32 1, %s2
  %s5 = scalar_select 0, %s4, %s2
  $region1: #{tpu_custom_call.1} parent=0
    #allocation2 [shape = 'u8[98304]{0}', space=vmem, size = 0x18000, scoped, tag = 'input window, operand 0']
    #allocation3 [shape = 's32[2]{0}', space=sflag, size = 0x8, scoped, tag = 'scoped memory for tpu_custom_call.1']
    #allocation4 [shape = 's32[2]{0}', space=sflag, size = 0x8, scoped, tag = 'scoped memory for tpu_custom_call.1']
    #allocation5 [shape = 'u8[98304]{0}', space=vmem, size = 0x18000, scoped, tag = 'output window, operand 0']
    %6 = vsyncpa [#allocation3], 0
    %s7 = scalar_lea.sflag [#allocation3], 1
    %8 = vsyncpa %s7, 0
    %9 = vsyncpa [#allocation4], 0
    %s10 = scalar_lea.sflag [#allocation4], 1
    %11 = vsyncpa %s10, 0
    loop: start=0, step=1, limit=4
    $region2: #{tpu_custom_call.1} parent=1 // loop_pre_header
      _
    $region3: #{tpu_custom_call.1} parent=1 // loop_header
      %s13 = sphi 0, %s17
      %p14 = scmp.ge.s32.totalorder %s13, 4
      %s20 = sphi 0, %s32
      %s21 = sphi 0, %s28
      %s22 = sphi 0, %s20
      %s23 = sphi 0, %s21
      %s24 = sphi 0, %s22
      %s25 = sphi 0, %s23
      %s37 = sphi 0, %s39
      %s40 = sphi 0, %s37
      %s41 = sphi 0, %s40
      %s57 = sphi 0, %s41
      %s65 = sphi 0, %s67
      %s68 = sphi 0, %s65
      %s69 = sphi 0, %s68
      %s85 = sphi 0, %s69
    $region4: #{tpu_custom_call.1} parent=1 // loop_header_branch
      %16 = sbr.rel (%p14) target = $region8
    $region5: #{tpu_custom_call.1} parent=1 // loop_body
      %s18 = ssub.s32 %s13, 1
      %s19 = ssub.s32 %s13, 2
      %s26 = sadd.s32 1, %s21
      %p27 = scmp.ge.s32.totalorder %s26, 1
      %s28 = scalar_select %p27, 0, %s26
      %s29 = sadd.s32 1, %s20
      %s30 = scalar_select %p27, %s29, %s20
      %p31 = scmp.ge.s32.totalorder %s30, 2
      %s32 = scalar_select %p31, 0, %s30
      %s33 = ssub.s32 %s20, %s32
      %s34 = ssub.s32 %s21, %s28
      %s35 = sor.u32 %s33, %s34
      %p36 = scmp.eq.s32.totalorder %s35, 0
      %s38 = sadd.s32 %s37, 1
      %s39 = scalar_select %p36, %s37, %s38
      %p42 = pneg %p36
      %p43 = scmp.eq.s32.totalorder %s13, 1
      %p44 = por %p42, %p43
      %p45 = scmp.ne.s32.totalorder %s37, %s40
      %p46 = scmp.eq.s32.totalorder %s13, 0
      %p47 = por %p45, %p46
      %p48 = scmp.ne.s32.totalorder %s37, %s40
      %p49 = scmp.eq.s32.totalorder %s18, 1
      %p50 = por %p48, %p49
      %p51 = scmp.ne.s32.totalorder %s40, %s41
      %p52 = scmp.eq.s32.totalorder %s18, 0
      %p53 = por %p51, %p52
      %p54 = scmp.ne.s32.totalorder %s40, %s41
      %p55 = scmp.eq.s32.totalorder %s19, 1
      %p56 = por %p54, %p55
      %p58 = scmp.ne.s32.totalorder %s41, %s57
      %p59 = scmp.eq.s32.totalorder %s19, 0
      %p60 = por %p58, %p59
      %s61 = ssub.s32 %s20, %s32
      %s62 = ssub.s32 %s21, %s28
      %s63 = sor.u32 %s61, %s62
      %p64 = scmp.eq.s32.totalorder %s63, 0
      %s66 = sadd.s32 %s65, 1
      %s67 = scalar_select %p64, %s65, %s66
      %p70 = pneg %p64
      %p71 = scmp.eq.s32.totalorder %s13, 1
      %p72 = por %p70, %p71
      %p73 = scmp.ne.s32.totalorder %s65, %s68
      %p74 = scmp.eq.s32.totalorder %s13, 0
      %p75 = por %p73, %p74
      %p76 = scmp.ne.s32.totalorder %s65, %s68
      %p77 = scmp.eq.s32.totalorder %s18, 1
      %p78 = por %p76, %p77
      %p79 = scmp.ne.s32.totalorder %s68, %s69
      %p80 = scmp.eq.s32.totalorder %s18, 0
      %p81 = por %p79, %p80
      %p82 = scmp.ne.s32.totalorder %s68, %s69
      %p83 = scmp.eq.s32.totalorder %s19, 1
      %p84 = por %p82, %p83
      %p86 = scmp.ne.s32.totalorder %s69, %s85
      %p87 = scmp.eq.s32.totalorder %s19, 0
      %p88 = por %p86, %p87
      %p89 = scmp.le.s32.totalorder 1, %s13
      %p90 = scmp.lt.s32.totalorder %s13, 3
      %p91 = pnand %p89, %p90
      %p92 = pneg %p91
      // Predicated region
      $region9: #{tpu_custom_call.1} parent=5 // pred_check
        _
      $region10: #{tpu_custom_call.1} parent=5 // pred_check_branch
        %94 = sbr.rel (%p91) target = $region12
      $region11: #{tpu_custom_call.1} parent=5 // pred_region
        %s95 = ssub.s32 %s13, 1
      $region12: #{tpu_custom_call.1} parent=5 // pred_fallthru
        _
      %p96 = scmp.lt.s32.totalorder %s13, 2
      // Predicated region
      $region13: #{tpu_custom_call.1} parent=5 // pred_check
        %p97 = pneg %p96
      $region14: #{tpu_custom_call.1} parent=5 // pred_check_branch
        %99 = sbr.rel (%p97) target = $region16
      $region15: #{tpu_custom_call.1} parent=5 // pred_region
        // Predicated region
        $region17: #{tpu_custom_call.1} parent=15 // pred_check
          %p100 = pneg %p47
        $region18: #{tpu_custom_call.1} parent=15 // pred_check_branch
          %102 = sbr.rel (%p100) target = $region20
        $region19: #{tpu_custom_call.1} parent=15 // pred_region
          %s103 = sand.u32 %s37, 1
          %s104 = scalar_lea.sflag [#allocation3], %s103
          %s105 = sand.u32 %s37, 1
          %s106 = smul.addr %s105, 96
          %s107 = scalar_lea.vmem [#allocation2], %s106
          %s109 = ssub.s32 1536, 1536
          %110 = vsyncadd %s104, %s109
          %s111 = smul.addr %s21, 4
          %s112 = smul.addr %s20, 12
          %s113 = sadd.s32 %s111, %s112
          %s114 = smul.addr %s113, 128
          %s115 = scalar_lea.hbm %s0, %s114
          %s116 = sshll.u32 %s107, 4
          %s117 = int_to_ptr.vmem [resolvable:$true] %s116
          %122 = dma.hbm_to_vmem [thread:$0]  %s115, 1536, %s117, %s104, 512, 512, 32
        $region20: #{tpu_custom_call.1} parent=15 // pred_fallthru
          _
      $region16: #{tpu_custom_call.1} parent=5 // pred_fallthru
        _
      %p123 = scmp.le.s32.totalorder 1, %s13
      %p124 = scmp.lt.s32.totalorder %s13, 3
      %p125 = pnand %p123, %p124
      %p126 = pneg %p125
      // Predicated region
      $region21: #{tpu_custom_call.1} parent=5 // pred_check
        _
      $region22: #{tpu_custom_call.1} parent=5 // pred_check_branch
        %128 = sbr.rel (%p125) target = $region24
      $region23: #{tpu_custom_call.1} parent=5 // pred_region
        %s129 = ssub.s32 %s13, 1
        %s130 = sand.u32 %s40, 1
        %s131 = scalar_lea.sflag [#allocation3], %s130
        %s132 = sand.u32 %s40, 1
        %s133 = smul.addr %s132, 96
        %s134 = scalar_lea.vmem [#allocation2], %s133
        // Predicated region
        $region25: #{tpu_custom_call.1} parent=23 // pred_check
          %p135 = pneg %p53
        $region26: #{tpu_custom_call.1} parent=23 // pred_check_branch
          %137 = sbr.rel (%p135) target = $region28
        $region27: #{tpu_custom_call.1} parent=23 // pred_region
          %138 = dma.done %s131, 1536
        $region28: #{tpu_custom_call.1} parent=23 // pred_fallthru
          _
        %s139 = sand.u32 %s40, 1
        %s140 = scalar_lea.sflag [#allocation3], %s139
        %s141 = sand.u32 %s40, 1
        %s142 = smul.addr %s141, 96
        %s143 = scalar_lea.vmem [#allocation2], %s142
        %p144 = pneg %p53
        %p145 = pneg %p50
        %p146 = pneg %p81
        %p147 = pneg %p78
        %s148 = sand.u32 %s68, 1
        %s149 = scalar_lea.sflag [#allocation4], %s148
        %s150 = sand.u32 %s68, 1
        %s151 = smul.addr %s150, 96
        %s152 = scalar_lea.vmem [#allocation5], %s151
        %v153 = vld [vmem:[%s134] sm:$0xff]
        %v154 = vld [vmem:[%s134 + $0x8] sm:$0xff]
        %v155 = vld [vmem:[%s134 + $0x10] sm:$0xff]
        %v156 = vld [vmem:[%s134 + $0x18] sm:$0xff]
        %v157 = vmax.f32 %v153, 0.0
        %v158 = vmax.f32 %v154, 0.0
        %v159 = vmax.f32 %v155, 0.0
        %v160 = vmax.f32 %v156, 0.0
        %v161 = vmin.f32 %v157, 1.0
        %v162 = vmin.f32 %v158, 1.0
        %v163 = vmin.f32 %v159, 1.0
        %v164 = vmin.f32 %v160, 1.0
        %s165 = scalar_lea.vmem %s134, 32 [#allocation2]
        %v166 = vld [vmem:[%s165] sm:$0xff]
        %v167 = vld [vmem:[%s165 + $0x8] sm:$0xff]
        %v168 = vld [vmem:[%s165 + $0x10] sm:$0xff]
        %v169 = vld [vmem:[%s165 + $0x18] sm:$0xff]
        %v170 = vmax.f32 %v166, 0.0
        %v171 = vmax.f32 %v167, 0.0
        %v172 = vmax.f32 %v168, 0.0
        %v173 = vmax.f32 %v169, 0.0
        %v174 = vmin.f32 %v170, 1.0
        %v175 = vmin.f32 %v171, 1.0
        %v176 = vmin.f32 %v172, 1.0
        %v177 = vmin.f32 %v173, 1.0
        %s178 = scalar_lea.vmem %s134, 64 [#allocation2]
        %v179 = vld [vmem:[%s178] sm:$0xff]
        %v180 = vld [vmem:[%s178 + $0x8] sm:$0xff]
        %v181 = vld [vmem:[%s178 + $0x10] sm:$0xff]
        %v182 = vld [vmem:[%s178 + $0x18] sm:$0xff]
        %v183 = vmax.f32 %v179, 0.0
        %v184 = vmax.f32 %v180, 0.0
        %v185 = vmax.f32 %v181, 0.0
        %v186 = vmax.f32 %v182, 0.0
        %v187 = vmin.f32 %v183, 1.0
        %v188 = vmin.f32 %v184, 1.0
        %v189 = vmin.f32 %v185, 1.0
        %v190 = vmin.f32 %v186, 1.0
        %v191 = vadd.f32 %v161, 16.0
        %v192 = vadd.f32 %v162, 16.0
        %v193 = vadd.f32 %v163, 16.0
        %v194 = vadd.f32 %v164, 16.0
        %v195 = vmul.f32 %v191, 0.00862069
        %v196 = vmul.f32 %v192, 0.00862069
        %v197 = vmul.f32 %v193, 0.00862069
        %v198 = vmul.f32 %v194, 0.00862069
        %v199 = vmul.f32 %v174, 0.002
        %v200 = vmul.f32 %v175, 0.002
        %v201 = vmul.f32 %v176, 0.002
        %v202 = vmul.f32 %v177, 0.002
        %v203 = vadd.f32 %v199, %v195
        %v204 = vadd.f32 %v200, %v196
        %v205 = vadd.f32 %v201, %v197
        %v206 = vadd.f32 %v202, %v198
        %v207 = vmul.f32 %v187, 0.005
        %v208 = vmul.f32 %v188, 0.005
        %v209 = vmul.f32 %v189, 0.005
        %v210 = vmul.f32 %v190, 0.005
        %v211 = vsub.f32 %v195, %v207
        %v212 = vsub.f32 %v196, %v208
        %v213 = vsub.f32 %v197, %v209
        %v214 = vsub.f32 %v198, %v210
        %v215 = vmax.f32 %v211, 0.0
        %v216 = vmax.f32 %v212, 0.0
        %v217 = vmax.f32 %v213, 0.0
        %v218 = vmax.f32 %v214, 0.0
        %vm219 = vcmp.gt.f32.partialorder %v203, 0.2068966
        %vm220 = vcmp.gt.f32.partialorder %v204, 0.2068966
        %vm221 = vcmp.gt.f32.partialorder %v205, 0.2068966
        %vm222 = vcmp.gt.f32.partialorder %v206, 0.2068966
        %v223 = vmul.f32 %v203, %v203
        %v224 = vmul.f32 %v204, %v204
        %v225 = vmul.f32 %v205, %v205
        %v226 = vmul.f32 %v206, %v206
        %v227 = vmul.f32 %v223, %v203
        %v228 = vmul.f32 %v224, %v204
        %v229 = vmul.f32 %v225, %v205
        %v230 = vmul.f32 %v226, %v206
        %v231 = vsub.f32 %v203, 0.13793103
        %v232 = vsub.f32 %v204, 0.13793103
        %v233 = vsub.f32 %v205, 0.13793103
        %v234 = vsub.f32 %v206, 0.13793103
        %v235 = vmul.f32 %v231, 0.12841916
        %v236 = vmul.f32 %v232, 0.12841916
        %v237 = vmul.f32 %v233, 0.12841916
        %v238 = vmul.f32 %v234, 0.12841916
        %v239 = vsel %vm219, %v227, %v235
        %v240 = vsel %vm220, %v228, %v236
        %v241 = vsel %vm221, %v229, %v237
        %v242 = vsel %vm222, %v230, %v238
        %vm243 = vcmp.gt.f32.partialorder %v195, 0.2068966
        %vm244 = vcmp.gt.f32.partialorder %v196, 0.2068966
        %vm245 = vcmp.gt.f32.partialorder %v197, 0.2068966
        %vm246 = vcmp.gt.f32.partialorder %v198, 0.2068966
        %v247 = vmul.f32 %v195, %v195
        %v248 = vmul.f32 %v196, %v196
        %v249 = vmul.f32 %v197, %v197
        %v250 = vmul.f32 %v198, %v198
        %v251 = vmul.f32 %v247, %v195
        %v252 = vmul.f32 %v248, %v196
        %v253 = vmul.f32 %v249, %v197
        %v254 = vmul.f32 %v250, %v198
        %v255 = vsub.f32 %v195, 0.13793103
        %v256 = vsub.f32 %v196, 0.13793103
        %v257 = vsub.f32 %v197, 0.13793103
        %v258 = vsub.f32 %v198, 0.13793103
        %v259 = vmul.f32 %v255, 0.12841916
        %v260 = vmul.f32 %v256, 0.12841916
        %v261 = vmul.f32 %v257, 0.12841916
        %v262 = vmul.f32 %v258, 0.12841916
        %v263 = vsel %vm243, %v251, %v259
        %v264 = vsel %vm244, %v252, %v260
        %v265 = vsel %vm245, %v253, %v261
        %v266 = vsel %vm246, %v254, %v262
        %vm267 = vcmp.gt.f32.partialorder %v215, 0.2068966
        %vm268 = vcmp.gt.f32.partialorder %v216, 0.2068966
        %vm269 = vcmp.gt.f32.partialorder %v217, 0.2068966
        %vm270 = vcmp.gt.f32.partialorder %v218, 0.2068966
        %v271 = vmul.f32 %v215, %v215
        %v272 = vmul.f32 %v216, %v216
        %v273 = vmul.f32 %v217, %v217
        %v274 = vmul.f32 %v218, %v218
        %v275 = vmul.f32 %v271, %v215
        %v276 = vmul.f32 %v272, %v216
        %v277 = vmul.f32 %v273, %v217
        %v278 = vmul.f32 %v274, %v218
        %v279 = vsub.f32 %v215, 0.13793103
        %v280 = vsub.f32 %v216, 0.13793103
        %v281 = vsub.f32 %v217, 0.13793103
        %v282 = vsub.f32 %v218, 0.13793103
        %v283 = vmul.f32 %v279, 0.12841916
        %v284 = vmul.f32 %v280, 0.12841916
        %v285 = vmul.f32 %v281, 0.12841916
        %v286 = vmul.f32 %v282, 0.12841916
        %v287 = vsel %vm267, %v275, %v283
        %v288 = vsel %vm268, %v276, %v284
        %v289 = vsel %vm269, %v277, %v285
        %v290 = vsel %vm270, %v278, %v286
        %v291 = vmul.f32 %v239, 3.0799804
        %v292 = vmul.f32 %v240, 3.0799804
        %v293 = vmul.f32 %v241, 3.0799804
        %v294 = vmul.f32 %v242, 3.0799804
        %v295 = vmul.f32 %v263, -1.5371516
        %v296 = vmul.f32 %v264, -1.5371516
        %v297 = vmul.f32 %v265, -1.5371516
        %v298 = vmul.f32 %v266, -1.5371516
        %v299 = vadd.f32 %v291, %v295
        %v300 = vadd.f32 %v292, %v296
        %v301 = vadd.f32 %v293, %v297
        %v302 = vadd.f32 %v294, %v298
        %v303 = vmul.f32 %v287, -0.5428213
        %v304 = vmul.f32 %v288, -0.5428213
        %v305 = vmul.f32 %v289, -0.5428213
        %v306 = vmul.f32 %v290, -0.5428213
        %v307 = vadd.f32 %v299, %v303
        %v308 = vadd.f32 %v300, %v304
        %v309 = vadd.f32 %v301, %v305
        %v310 = vadd.f32 %v302, %v306
        %v311 = vmul.f32 %v239, -0.9212478
        %v312 = vmul.f32 %v240, -0.9212478
        %v313 = vmul.f32 %v241, -0.9212478
        %v314 = vmul.f32 %v242, -0.9212478
        %v315 = vmul.f32 %v263, 1.87599
        %v316 = vmul.f32 %v264, 1.87599
        %v317 = vmul.f32 %v265, 1.87599
        %v318 = vmul.f32 %v266, 1.87599
        %v319 = vadd.f32 %v311, %v315
        %v320 = vadd.f32 %v312, %v316
        %v321 = vadd.f32 %v313, %v317
        %v322 = vadd.f32 %v314, %v318
        %v323 = vmul.f32 %v287, 0.04524734
        %v324 = vmul.f32 %v288, 0.04524734
        %v325 = vmul.f32 %v289, 0.04524734
        %v326 = vmul.f32 %v290, 0.04524734
        %v327 = vadd.f32 %v319, %v323
        %v328 = vadd.f32 %v320, %v324
        %v329 = vadd.f32 %v321, %v325
        %v330 = vadd.f32 %v322, %v326
        %v331 = vmul.f32 %v239, 0.05289046
        %v332 = vmul.f32 %v240, 0.05289046
        %v333 = vmul.f32 %v241, 0.05289046
        %v334 = vmul.f32 %v242, 0.05289046
        %v335 = vmul.f32 %v263, -0.20404133
        %v336 = vmul.f32 %v264, -0.20404133
        %v337 = vmul.f32 %v265, -0.20404133
        %v338 = vmul.f32 %v266, -0.20404133
        %v339 = vadd.f32 %v331, %v335
        %v340 = vadd.f32 %v332, %v336
        %v341 = vadd.f32 %v333, %v337
        %v342 = vadd.f32 %v334, %v338
        %v343 = vmul.f32 %v287, 1.151232
        %v344 = vmul.f32 %v288, 1.151232
        %v345 = vmul.f32 %v289, 1.151232
        %v346 = vmul.f32 %v290, 1.151232
        %v347 = vadd.f32 %v339, %v343
        %v348 = vadd.f32 %v340, %v344
        %v349 = vadd.f32 %v341, %v345
        %v350 = vadd.f32 %v342, %v346
        %vm351 = vcmp.gt.f32.partialorder %v307, 0.0031308
        %vm352 = vcmp.gt.f32.partialorder %v308, 0.0031308
        %vm353 = vcmp.gt.f32.partialorder %v309, 0.0031308
        %vm354 = vcmp.gt.f32.partialorder %v310, 0.0031308
        %v355 = vmax.f32 %v307, 0.0031308
        %v356 = vmax.f32 %v308, 0.0031308
        %v357 = vmax.f32 %v309, 0.0031308
        %v358 = vmax.f32 %v310, 0.0031308
        %v359 = vpow.f32 %v355, 0.41666666
        %v360 = vpow.f32 %v356, 0.41666666
        %v361 = vpow.f32 %v357, 0.41666666
        %v362 = vpow.f32 %v358, 0.41666666
        %v363 = vmul.f32 %v359, 1.055
        %v364 = vmul.f32 %v360, 1.055
        %v365 = vmul.f32 %v361, 1.055
        %v366 = vmul.f32 %v362, 1.055
        %v367 = vsub.f32 %v363, 0.055
        %v368 = vsub.f32 %v364, 0.055
        %v369 = vsub.f32 %v365, 0.055
        %v370 = vsub.f32 %v366, 0.055
        %v371 = vmul.f32 %v307, 12.92
        %v372 = vmul.f32 %v308, 12.92
        %v373 = vmul.f32 %v309, 12.92
        %v374 = vmul.f32 %v310, 12.92
        %v375 = vsel %vm351, %v367, %v371
        %v376 = vsel %vm352, %v368, %v372
        %v377 = vsel %vm353, %v369, %v373
        %v378 = vsel %vm354, %v370, %v374
        %v379 = vmax.f32 %v375, 0.0
        %v380 = vmax.f32 %v376, 0.0
        %v381 = vmax.f32 %v377, 0.0
        %v382 = vmax.f32 %v378, 0.0
        %v383 = vmin.f32 %v379, 1.0
        %v384 = vmin.f32 %v380, 1.0
        %v385 = vmin.f32 %v381, 1.0
        %v386 = vmin.f32 %v382, 1.0
        %387 = vst [vmem:[%s152] sm:$0xff] %v383
        %388 = vst [vmem:[%s152 + $0x8] sm:$0xff] %v384
        %389 = vst [vmem:[%s152 + $0x10] sm:$0xff] %v385
        %390 = vst [vmem:[%s152 + $0x18] sm:$0xff] %v386
        %vm391 = vcmp.gt.f32.partialorder %v327, 0.0031308
        %vm392 = vcmp.gt.f32.partialorder %v328, 0.0031308
        %vm393 = vcmp.gt.f32.partialorder %v329, 0.0031308
        %vm394 = vcmp.gt.f32.partialorder %v330, 0.0031308
        %v395 = vmax.f32 %v327, 0.0031308
        %v396 = vmax.f32 %v328, 0.0031308
        %v397 = vmax.f32 %v329, 0.0031308
        %v398 = vmax.f32 %v330, 0.0031308
        %v399 = vpow.f32 %v395, 0.41666666
        %v400 = vpow.f32 %v396, 0.41666666
        %v401 = vpow.f32 %v397, 0.41666666
        %v402 = vpow.f32 %v398, 0.41666666
        %v403 = vmul.f32 %v399, 1.055
        %v404 = vmul.f32 %v400, 1.055
        %v405 = vmul.f32 %v401, 1.055
        %v406 = vmul.f32 %v402, 1.055
        %v407 = vsub.f32 %v403, 0.055
        %v408 = vsub.f32 %v404, 0.055
        %v409 = vsub.f32 %v405, 0.055
        %v410 = vsub.f32 %v406, 0.055
        %v411 = vmul.f32 %v327, 12.92
        %v412 = vmul.f32 %v328, 12.92
        %v413 = vmul.f32 %v329, 12.92
        %v414 = vmul.f32 %v330, 12.92
        %v415 = vsel %vm391, %v407, %v411
        %v416 = vsel %vm392, %v408, %v412
        %v417 = vsel %vm393, %v409, %v413
        %v418 = vsel %vm394, %v410, %v414
        %v419 = vmax.f32 %v415, 0.0
        %v420 = vmax.f32 %v416, 0.0
        %v421 = vmax.f32 %v417, 0.0
        %v422 = vmax.f32 %v418, 0.0
        %v423 = vmin.f32 %v419, 1.0
        %v424 = vmin.f32 %v420, 1.0
        %v425 = vmin.f32 %v421, 1.0
        %v426 = vmin.f32 %v422, 1.0
        %s427 = scalar_lea.vmem %s152, 32 [#allocation5]
        %428 = vst [vmem:[%s427] sm:$0xff] %v423
        %429 = vst [vmem:[%s427 + $0x8] sm:$0xff] %v424
        %430 = vst [vmem:[%s427 + $0x10] sm:$0xff] %v425
        %431 = vst [vmem:[%s427 + $0x18] sm:$0xff] %v426
        %vm432 = vcmp.gt.f32.partialorder %v347, 0.0031308
        %vm433 = vcmp.gt.f32.partialorder %v348, 0.0031308
        %vm434 = vcmp.gt.f32.partialorder %v349, 0.0031308
        %vm435 = vcmp.gt.f32.partialorder %v350, 0.0031308
        %v436 = vmax.f32 %v347, 0.0031308
        %v437 = vmax.f32 %v348, 0.0031308
        %v438 = vmax.f32 %v349, 0.0031308
        %v439 = vmax.f32 %v350, 0.0031308
        %v440 = vpow.f32 %v436, 0.41666666
        %v441 = vpow.f32 %v437, 0.41666666
        %v442 = vpow.f32 %v438, 0.41666666
        %v443 = vpow.f32 %v439, 0.41666666
        %v444 = vmul.f32 %v440, 1.055
        %v445 = vmul.f32 %v441, 1.055
        %v446 = vmul.f32 %v442, 1.055
        %v447 = vmul.f32 %v443, 1.055
        %v448 = vsub.f32 %v444, 0.055
        %v449 = vsub.f32 %v445, 0.055
        %v450 = vsub.f32 %v446, 0.055
        %v451 = vsub.f32 %v447, 0.055
        %v452 = vmul.f32 %v347, 12.92
        %v453 = vmul.f32 %v348, 12.92
        %v454 = vmul.f32 %v349, 12.92
        %v455 = vmul.f32 %v350, 12.92
        %v456 = vsel %vm432, %v448, %v452
        %v457 = vsel %vm433, %v449, %v453
        %v458 = vsel %vm434, %v450, %v454
        %v459 = vsel %vm435, %v451, %v455
        %v460 = vmax.f32 %v456, 0.0
        %v461 = vmax.f32 %v457, 0.0
        %v462 = vmax.f32 %v458, 0.0
        %v463 = vmax.f32 %v459, 0.0
        %v464 = vmin.f32 %v460, 1.0
        %v465 = vmin.f32 %v461, 1.0
        %v466 = vmin.f32 %v462, 1.0
        %v467 = vmin.f32 %v463, 1.0
        %s468 = scalar_lea.vmem %s152, 64 [#allocation5]
        %469 = vst [vmem:[%s468] sm:$0xff] %v464
        %470 = vst [vmem:[%s468 + $0x8] sm:$0xff] %v465
        %471 = vst [vmem:[%s468 + $0x10] sm:$0xff] %v466
        %472 = vst [vmem:[%s468 + $0x18] sm:$0xff] %v467
        %s473 = sand.u32 %s68, 1
        %s474 = scalar_lea.sflag [#allocation4], %s473
        %s475 = sand.u32 %s68, 1
        %s476 = smul.addr %s475, 96
        %s477 = scalar_lea.vmem [#allocation5], %s476
        // Predicated region
        $region29: #{tpu_custom_call.1} parent=23 // pred_check
          %p478 = pneg %p78
        $region30: #{tpu_custom_call.1} parent=23 // pred_check_branch
          %480 = sbr.rel (%p478) target = $region32
        $region31: #{tpu_custom_call.1} parent=23 // pred_region
          %s482 = ssub.s32 1536, 1536
          %483 = vsyncadd %s474, %s482
          %s484 = smul.addr %s23, 4
          %s485 = smul.addr %s22, 12
          %s486 = sadd.s32 %s484, %s485
          %s487 = smul.addr %s486, 128
          %s488 = scalar_lea.hbm %s1, %s487
          %s489 = sshll.u32 %s477, 4
          %s490 = int_to_ptr.vmem [resolvable:$true] %s489
          %495 = dma.vmem_to_hbm [thread:$0]  %s490, 1536, %s488, %s474, 512, 512, 32
        $region32: #{tpu_custom_call.1} parent=23 // pred_fallthru
          _
      $region24: #{tpu_custom_call.1} parent=5 // pred_fallthru
        _
      %p496 = scmp.le.s32.totalorder 2, %s13
      // Predicated region
      $region33: #{tpu_custom_call.1} parent=5 // pred_check
        %p497 = pneg %p496
      $region34: #{tpu_custom_call.1} parent=5 // pred_check_branch
        %499 = sbr.rel (%p497) target = $region36
      $region35: #{tpu_custom_call.1} parent=5 // pred_region
        %s500 = ssub.s32 %s13, 2
        // Predicated region
        $region37: #{tpu_custom_call.1} parent=35 // pred_check
          %p501 = pneg %p84
        $region38: #{tpu_custom_call.1} parent=35 // pred_check_branch
          %503 = sbr.rel (%p501) target = $region40
        $region39: #{tpu_custom_call.1} parent=35 // pred_region
          %s504 = sand.u32 %s69, 1
          %s505 = scalar_lea.sflag [#allocation4], %s504
          %s506 = sand.u32 %s69, 1
          %s507 = smul.addr %s506, 96
          %s508 = scalar_lea.vmem [#allocation5], %s507
          %509 = dma.done %s505, 1536
        $region40: #{tpu_custom_call.1} parent=35 // pred_fallthru
          _
      $region36: #{tpu_custom_call.1} parent=5 // pred_fallthru
        _
    $region6: #{tpu_custom_call.1} parent=1 // loop_footer
      %s17 = sadd.s32 1, %s13
    $region7: #{tpu_custom_call.1} parent=1 // loop_footer_branch
      %12 = sbr.rel target = $region3
    $region8: #{tpu_custom_call.1} parent=1 // loop_exit
      _
    %510 = vsyncpa [#allocation3], 1
    %s511 = scalar_lea.sflag [#allocation3], 1
    %512 = vsyncpa %s511, 1
    %513 = vsyncpa [#allocation4], 1
    %s514 = scalar_lea.sflag [#allocation4], 1
    %515 = vsyncpa %s514, 1

</llo_original>
